<compile_context>
chip_gen: v6e
topology: v6e:2x2x1
jax: 0.10.0
libtpu: 0.0.40
codegen_flags: <defaults>
</compile_context>

<pallas_src>
import functools
import math

import jax
import jax.numpy as jnp
from jax import lax
from jax.experimental import pallas as pl
from jax.experimental.pallas import tpu as pltpu

_VMEM_LIMIT = 48 * 1024 * 1024  # explicit scoped-VMEM cap; fits v7x (64 MiB/TC) with headroom


def _pick_tile(dim, target, align):
    """Largest multiple of `align` that divides `dim` and is <= target, else full dim."""
    if dim <= target:
        return dim
    t = (target // align) * align
    while t >= align:
        if dim % t == 0:
            return t
        t -= align
    return dim


# ----------------------------- Pallas kernels ------------------------------

def _matmul_kernel(x_ref, w_ref, b_ref, o_ref, acc_ref, *, activation):
    """Tiled y = act(x @ w + b); grid = (M-tiles, N-tiles, K-tiles)."""
    k = pl.program_id(2)

    @pl.when(k == 0)
    def _():
        acc_ref[...] = jnp.zeros_like(acc_ref)

    acc_ref[...] += jnp.dot(x_ref[...].astype(jnp.bfloat16),
                            w_ref[...].astype(jnp.bfloat16),
                            preferred_element_type=jnp.float32)

    @pl.when(k == pl.num_programs(2) - 1)
    def _():
        y = acc_ref[...] + b_ref[...]
        if activation == "gelu":
            # TODO(synk): HF BERT default is exact erf-GELU; tanh approximation used here.
            c = 0.7978845608028654
            y = 0.5 * y * (1.0 + jnp.tanh(c * (y + 0.044715 * y * y * y)))
        elif activation == "tanh":
            y = jnp.tanh(y)
        o_ref[...] = y


def _matmul_res_ln_kernel(x_ref, w_ref, b_ref, r_ref, g_ref, be_ref, o_ref, acc_ref, *, eps):
    """Fused y = LayerNorm((x @ w + b) + residual); grid = (M-tiles, K-tiles)."""
    k = pl.program_id(1)

    @pl.when(k == 0)
    def _():
        acc_ref[...] = jnp.zeros_like(acc_ref)

    acc_ref[...] += jnp.dot(x_ref[...].astype(jnp.bfloat16),
                            w_ref[...].astype(jnp.bfloat16),
                            preferred_element_type=jnp.float32)

    @pl.when(k == pl.num_programs(1) - 1)
    def _():
        y = acc_ref[...] + b_ref[...] + r_ref[...]
        mean = jnp.mean(y, axis=-1, keepdims=True)
        var = jnp.mean((y - mean) ** 2, axis=-1, keepdims=True)
        o_ref[...] = (y - mean) * lax.rsqrt(var + eps) * g_ref[...] + be_ref[...]


def _layernorm_kernel(x_ref, g_ref, b_ref, o_ref, *, eps):
    x = x_ref[...]
    mean = jnp.mean(x, axis=-1, keepdims=True)
    var = jnp.mean((x - mean) ** 2, axis=-1, keepdims=True)
    o_ref[...] = (x - mean) * lax.rsqrt(var + eps) * g_ref[...] + b_ref[...]


def _attention_kernel(qkv_ref, m_ref, o_ref, *, scale, num_heads, head_dim, hidden):
    """Per-batch attention on fused-QKV layout. Scores held per-head ((S,S)), never (NH,S,S)."""
    qkv = qkv_ref[0]          # (S, 3H) f32
    mask = m_ref[0]           # (1, S) additive mask (0 / -1e4), f32
    ctx_heads = []
    for h in range(num_heads):                        # static unroll over heads
        lo = h * head_dim
        q = qkv[:, lo:lo + head_dim]
        k = qkv[:, hidden + lo:hidden + lo + head_dim]
        v = qkv[:, 2 * hidden + lo:2 * hidden + lo + head_dim]
        # scores: contract head_dim of q and k (bf16 MXU operands, f32 accumulation)
        s = lax.dot_general(q.astype(jnp.bfloat16), k.astype(jnp.bfloat16),
                            (((1,), (1,)), ((), ())),
                            preferred_element_type=jnp.float32) * scale
        s = s + mask                                  # f32 mask add
        m = jnp.max(s, axis=-1, keepdims=True)
        p = jnp.exp(s - m)
        denom = jnp.sum(p, axis=-1, keepdims=True)
        p = p * pl.reciprocal(denom, approx=True)     # EUP reciprocal instead of VALU divide
        ctx_heads.append(jnp.dot(p.astype(jnp.bfloat16), v.astype(jnp.bfloat16),
                                 preferred_element_type=jnp.float32))
    o_ref[0] = jnp.concatenate(ctx_heads, axis=-1)    # (S, H) -- heads merged in-kernel


def _pooler_head_kernel(cls_ref, wp_ref, bp_ref, wo_ref, bo_ref, o_ref):
    """Fused pooler tanh + dropout(identity, eval) + classifier head."""
    pooled = jnp.tanh(
        jnp.dot(cls_ref[...].astype(jnp.bfloat16), wp_ref[...].astype(jnp.bfloat16),
                preferred_element_type=jnp.float32) + bp_ref[...])
    o_ref[...] = jnp.dot(pooled.astype(jnp.bfloat16), wo_ref[...].astype(jnp.bfloat16),
                         preferred_element_type=jnp.float32) + bo_ref[...]


# ----------------------------- Pallas wrappers ------------------------------

def pallas_linear(x, w, b, activation=None):
    M, K = x.shape
    N = w.shape[1]
    tm = _pick_tile(M, 256, 8)      # 256-row cap keeps tiles v7x-safe
    tn = _pick_tile(N, 512, 128)
    tk = _pick_tile(K, 512, 128)
    kernel = functools.partial(_matmul_kernel, activation=activation)
    return pl.pallas_call(
        kernel,
        out_shape=jax.ShapeDtypeStruct((M, N), jnp.float32),
        grid=(M // tm, N // tn, K // tk),
        in_specs=[
            pl.BlockSpec((tm, tk), lambda i, j, k: (i, k)),
            pl.BlockSpec((tk, tn), lambda i, j, k: (k, j)),
            pl.BlockSpec((1, tn), lambda i, j, k: (0, j)),
        ],
        out_specs=pl.BlockSpec((tm, tn), lambda i, j, k: (i, j)),
        scratch_shapes=[pltpu.VMEM((tm, tn), jnp.float32)],
        compiler_params=pltpu.CompilerParams(
            dimension_semantics=("parallel", "parallel", "arbitrary"),
            vmem_limit_bytes=_VMEM_LIMIT),
    )(x, w, b.reshape(1, N))


def pallas_linear_res_ln(x, w, b, residual, gamma, beta, eps=1e-12):
    M, K = x.shape
    H = w.shape[1]
    tm = _pick_tile(M, 256, 8)
    tk = _pick_tile(K, 512, 128)
    kernel = functools.partial(_matmul_res_ln_kernel, eps=eps)
    return pl.pallas_call(
        kernel,
        out_shape=jax.ShapeDtypeStruct((M, H), jnp.float32),
        grid=(M // tm, K // tk),
        in_specs=[
            pl.BlockSpec((tm, tk), lambda i, k: (i, k)),
            pl.BlockSpec((tk, H), lambda i, k: (k, 0)),
            pl.BlockSpec((1, H), lambda i, k: (0, 0)),
            pl.BlockSpec((tm, H), lambda i, k: (i, 0)),
            pl.BlockSpec((1, H), lambda i, k: (0, 0)),
            pl.BlockSpec((1, H), lambda i, k: (0, 0)),
        ],
        out_specs=pl.BlockSpec((tm, H), lambda i, k: (i, 0)),
        scratch_shapes=[pltpu.VMEM((tm, H), jnp.float32)],
        compiler_params=pltpu.CompilerParams(
            dimension_semantics=("parallel", "arbitrary"),
            vmem_limit_bytes=_VMEM_LIMIT),
    )(x, w, b.reshape(1, H), residual, gamma.reshape(1, H), beta.reshape(1, H))


def pallas_layernorm(x, gamma, beta, eps=1e-12):
    M, H = x.shape
    tm = _pick_tile(M, 512, 8)
    kernel = functools.partial(_layernorm_kernel, eps=eps)
    return pl.pallas_call(
        kernel,
        out_shape=jax.ShapeDtypeStruct((M, H), jnp.float32),
        grid=(M // tm,),
        in_specs=[
            pl.BlockSpec((tm, H), lambda i: (i, 0)),
            pl.BlockSpec((1, H), lambda i: (0, 0)),
            pl.BlockSpec((1, H), lambda i: (0, 0)),
        ],
        out_specs=pl.BlockSpec((tm, H), lambda i: (i, 0)),
        compiler_params=pltpu.CompilerParams(
            dimension_semantics=("parallel",),
            vmem_limit_bytes=_VMEM_LIMIT),
    )(x, gamma.reshape(1, H), beta.reshape(1, H))


def pallas_attention(qkv, add_mask, num_heads, head_dim):
    B, S, threeH = qkv.shape
    H = num_heads * head_dim
    scale = 1.0 / math.sqrt(head_dim)
    kernel = functools.partial(_attention_kernel, scale=scale,
                               num_heads=num_heads, head_dim=head_dim, hidden=H)
    return pl.pallas_call(
        kernel,
        out_shape=jax.ShapeDtypeStruct((B, S, H), jnp.float32),
        grid=(B,),
        in_specs=[
            pl.BlockSpec((1, S, threeH), lambda b: (b, 0, 0)),
            pl.BlockSpec((1, 1, S), lambda b: (b, 0, 0)),
        ],
        out_specs=pl.BlockSpec((1, S, H), lambda b: (b, 0, 0)),
        compiler_params=pltpu.CompilerParams(
            dimension_semantics=("parallel",),
            vmem_limit_bytes=_VMEM_LIMIT),
    )(qkv, add_mask)


def pallas_pooler_head(cls, wp, bp, wo, bo):
    B, H = cls.shape
    C = wo.shape[1]
    return pl.pallas_call(
        _pooler_head_kernel,
        out_shape=jax.ShapeDtypeStruct((B, C), jnp.float32),
        in_specs=[
            pl.BlockSpec((B, H), lambda: (0, 0)),
            pl.BlockSpec((H, H), lambda: (0, 0)),
            pl.BlockSpec((1, H), lambda: (0, 0)),
            pl.BlockSpec((H, C), lambda: (0, 0)),
            pl.BlockSpec((1, C), lambda: (0, 0)),
        ],
        out_specs=pl.BlockSpec((B, C), lambda: (0, 0)),
        compiler_params=pltpu.CompilerParams(vmem_limit_bytes=_VMEM_LIMIT),
    )(cls, wp, bp.reshape(1, H), wo, bo.reshape(1, C))


# ----------------------------- model forward ------------------------------

def bert_layer(x, p, ext_mask, B, S, NH, DH):
    H = NH * DH
    # fused Q/K/V projection: one matmul, (B*S, 3H)
    qkv = pallas_linear(x, p["qkv_w"], p["qkv_b"])
    # attention directly on (B, S, 3H) layout -> (B, S, H); only free reshapes outside
    ctx = pallas_attention(qkv.reshape(B, S, 3 * H), ext_mask, NH, DH)
    ctx = ctx.reshape(B * S, H)
    # attn output projection + residual + LayerNorm, fused
    x = pallas_linear_res_ln(ctx, p["ao"]["w"], p["ao"]["b"], x, p["ln1_g"], p["ln1_b"])
    # FFN
    inter = pallas_linear(x, p["ff1"]["w"], p["ff1"]["b"], activation="gelu")
    x = pallas_linear_res_ln(inter, p["ff2"]["w"], p["ff2"]["b"], x, p["ln2_g"], p["ln2_b"])
    return x


def stance_classifier_forward(params, cfg, input_ids, attention_mask):
    B, S = input_ids.shape
    H, NH, DH = cfg["hidden"], cfg["num_heads"], cfg["head_dim"]

    # --- embeddings (gather = glue) ---
    x = (params["word_emb"][input_ids]
         + params["pos_emb"][:S][None, :, :]
         + params["type_emb"][0][None, None, :])
    x = x.reshape(B * S, H)
    x = pallas_layernorm(x, params["emb_ln_g"], params["emb_ln_b"])

    # additive attention mask: 0 for tokens, -1e4 for padding
    ext_mask = (1.0 - attention_mask.astype(jnp.float32)) * -10000.0
    ext_mask = ext_mask.reshape(B, 1, S)

    for lp in params["layers"]:
        x = bert_layer(x, lp, ext_mask, B, S, NH, DH)

    # --- pooler tanh + dropout(p=0.3, eval identity) + classifier head, one kernel ---
    cls = x.reshape(B, S, H)[:, 0, :]
    logits = pallas_pooler_head(cls, params["pooler"]["w"], params["pooler"]["b"],
                                params["out"]["w"], params["out"]["b"])
    return logits


# ----------------------------- param init ------------------------------

def init_params(key, cfg):
    keys = iter(jax.random.split(key, 128))

    def dense(din, dout):
        return {"w": 0.02 * jax.random.normal(next(keys), (din, dout), jnp.float32),
                "b": jnp.zeros((dout,), jnp.float32)}

    H, FF = cfg["hidden"], cfg["ffn"]
    params = {
        "word_emb": 0.02 * jax.random.normal(next(keys), (cfg["vocab"], H), jnp.float32),
        "pos_emb": 0.02 * jax.random.normal(next(keys), (cfg["max_pos"], H), jnp.float32),
        "type_emb": 0.02 * jax.random.normal(next(keys), (2, H), jnp.float32),
        "emb_ln_g": jnp.ones((H,), jnp.float32),
        "emb_ln_b": jnp.zeros((H,), jnp.float32),
        "layers": [],
        "pooler": dense(H, H),
        "out": dense(H, cfg["num_classes"]),
    }
    for _ in range(cfg["num_layers"]):
        q, k, v = dense(H, H), dense(H, H), dense(H, H)
        params["layers"].append({
            # fused QKV weights: (H, 3H) / (3H,)
            "qkv_w": jnp.concatenate([q["w"], k["w"], v["w"]], axis=1),
            "qkv_b": jnp.concatenate([q["b"], k["b"], v["b"]], axis=0),
            "ao": dense(H, H),
            "ln1_g": jnp.ones((H,), jnp.float32), "ln1_b": jnp.zeros((H,), jnp.float32),
            "ff1": dense(H, FF), "ff2": dense(FF, H),
            "ln2_g": jnp.ones((H,), jnp.float32), "ln2_b": jnp.zeros((H,), jnp.float32),
        })
    return params


# ----------------------------- main ------------------------------

if __name__ == "__main__":
    cfg = dict(vocab=100, hidden=32, num_heads=4, head_dim=8, ffn=64,
               num_layers=2, max_pos=16, num_classes=4)
    B, S = 2, 8

    root = jax.random.PRNGKey(0)
    k_params, k_ids = jax.random.split(root)

    params = init_params(k_params, cfg)

    input_ids = jax.random.randint(k_ids, (B, S), 0, cfg["vocab"], dtype=jnp.int32)
    attention_mask = jnp.ones((B, S), dtype=jnp.int32)
    attention_mask = attention_mask.at[1, 6:].set(0)   # batch 1 has 2 padding tokens

    logits = stance_classifier_forward(params, cfg, input_ids, attention_mask)
    jax.block_until_ready(logits)

    assert logits.shape == (B, cfg["num_classes"])
    print("KERNEL_OK")
</pallas_src>

<mosaic_0001>
module attributes {stable_mosaic.version = 11 : i64} {
  func.func @_layernorm_kernel(%arg0: i32, %arg1: memref<16x32xf32, #tpu.memory_space<vmem>>, %arg2: memref<1x32xf32, #tpu.memory_space<vmem>>, %arg3: memref<1x32xf32, #tpu.memory_space<vmem>>, %arg4: memref<16x32xf32, #tpu.memory_space<vmem>>) attributes {dimension_semantics = [#tpu.dimension_semantics<parallel>], iteration_bounds = array<i64: 1>, scalar_prefetch = 0 : i64, scratch_operands = 0 : i64, tpu.core_type = #tpu.core_type<tc>, window_params = [{transform_indices = @transform_0, window_bounds = array<i64: 16, 32>}, {pipeline_mode = #tpu.pipeline_mode<synchronous>, transform_indices = @transform_1, window_bounds = array<i64: 1, 32>}, {pipeline_mode = #tpu.pipeline_mode<synchronous>, transform_indices = @transform_2, window_bounds = array<i64: 1, 32>}, {transform_indices = @transform_3, window_bounds = array<i64: 16, 32>}]} {
    %c0 = arith.constant 0 : index
    %c0_0 = arith.constant 0 : index
    %0 = vector.load %arg1[%c0, %c0_0] : memref<16x32xf32, #tpu.memory_space<vmem>>, vector<16x32xf32>
    %cst = arith.constant dense<0.000000e+00> : vector<16xf32>
    %1 = vector.multi_reduction <add>, %0, %cst [1] : vector<16x32xf32> to vector<16xf32>
    %2 = vector.shape_cast %1 : vector<16xf32> to vector<16x1xf32>
    %cst_1 = arith.constant 3.200000e+01 : f32
    %3 = vector.broadcast %cst_1 : f32 to vector<16x1xf32>
    %4 = arith.divf %2, %3 : vector<16x1xf32>
    %5 = vector.broadcast %4 : vector<16x1xf32> to vector<16x32xf32>
    %6 = arith.subf %0, %5 : vector<16x32xf32>
    %7 = arith.mulf %6, %6 : vector<16x32xf32>
    %cst_2 = arith.constant dense<0.000000e+00> : vector<16xf32>
    %8 = vector.multi_reduction <add>, %7, %cst_2 [1] : vector<16x32xf32> to vector<16xf32>
    %9 = vector.shape_cast %8 : vector<16xf32> to vector<16x1xf32>
    %cst_3 = arith.constant 3.200000e+01 : f32
    %10 = vector.broadcast %cst_3 : f32 to vector<16x1xf32>
    %11 = arith.divf %9, %10 : vector<16x1xf32>
    %12 = vector.broadcast %4 : vector<16x1xf32> to vector<16x32xf32>
    %13 = arith.subf %0, %12 : vector<16x32xf32>
    %cst_4 = arith.constant 9.99999996E-13 : f32
    %14 = vector.broadcast %cst_4 : f32 to vector<16x1xf32>
    %15 = arith.addf %11, %14 : vector<16x1xf32>
    %16 = math.rsqrt %15 : vector<16x1xf32>
    %17 = vector.broadcast %16 : vector<16x1xf32> to vector<16x32xf32>
    %18 = arith.mulf %13, %17 : vector<16x32xf32>
    %c0_5 = arith.constant 0 : index
    %c0_6 = arith.constant 0 : index
    %19 = vector.load %arg2[%c0_5, %c0_6] : memref<1x32xf32, #tpu.memory_space<vmem>>, vector<1x32xf32>
    %20 = vector.broadcast %19 : vector<1x32xf32> to vector<16x32xf32>
    %21 = arith.mulf %18, %20 : vector<16x32xf32>
    %c0_7 = arith.constant 0 : index
    %c0_8 = arith.constant 0 : index
    %22 = vector.load %arg3[%c0_7, %c0_8] : memref<1x32xf32, #tpu.memory_space<vmem>>, vector<1x32xf32>
    %23 = vector.broadcast %22 : vector<1x32xf32> to vector<16x32xf32>
    %24 = arith.addf %21, %23 : vector<16x32xf32>
    %c0_9 = arith.constant 0 : index
    %c0_10 = arith.constant 0 : index
    %25 = vector.load %arg4[%c0_9, %c0_10] : memref<16x32xf32, #tpu.memory_space<vmem>>, vector<16x32xf32>
    tpu.vector_store %arg4[%c0_9, %c0_10], %24 {strides = array<i32>} : memref<16x32xf32, #tpu.memory_space<vmem>>, vector<16x32xf32>,
    return
  }
  func.func @transform_0(%arg0: i32) -> (i32, i32) {
    %c0_i32 = arith.constant 0 : i32
    %c0_i32_0 = arith.constant 0 : i32
    return %arg0, %c0_i32 : i32, i32
  }
  func.func @transform_1(%arg0: i32) -> (i32, i32) {
    %c0_i32 = arith.constant 0 : i32
    %c0_i32_0 = arith.constant 0 : i32
    %c0_i32_1 = arith.constant 0 : i32
    return %c0_i32, %c0_i32_0 : i32, i32
  }
  func.func @transform_2(%arg0: i32) -> (i32, i32) {
    %c0_i32 = arith.constant 0 : i32
    %c0_i32_0 = arith.constant 0 : i32
    %c0_i32_1 = arith.constant 0 : i32
    return %c0_i32, %c0_i32_0 : i32, i32
  }
  func.func @transform_3(%arg0: i32) -> (i32, i32) {
    %c0_i32 = arith.constant 0 : i32
    %c0_i32_0 = arith.constant 0 : i32
    return %arg0, %c0_i32 : i32, i32
  }
}

</mosaic_0001>

<llo_original>
// kernel: tpu_custom_call.1
$region0: #{tpu_custom_call.1}
  #allocation0 [shape = 'u32[]', space=smem, size = 0x4, offset = 0x4, fixed_abs, tag = 'smem constant byte address 0x4 - core index']
  #allocation1 [shape = 'u32[144,128]{1,0:T(1,128)}', space=vmem, size = 0x12000, scoped, tag = 'internal scratch']
  %s0 = inlined_call_operand.hbm [shape: f32[16,32], index: 0, kind: input, shape index: {}]
  %s1 = inlined_call_operand.vmem [shape: f32[1,32], index: 1, kind: input, shape index: {}]
  %s2 = inlined_call_operand.vmem [shape: f32[1,32], index: 2, kind: input, shape index: {}]
  %s3 = inlined_call_operand.hbm [shape: f32[16,32], index: 3, kind: output, shape index: {}]
  %s4 = sld [smem:[#allocation0]]
  $region26: #{tpu_custom_call.1} parent=0
    _
  %s6 = ssub.s32 1, %s4
  %s7 = scalar_select 0, %s6, %s4
  $region1: #{tpu_custom_call.1} parent=0
    #allocation2 [shape = 'u8[8192]{0}', space=vmem, size = 0x2000, scoped, tag = 'input window, operand 0, single buffered']
    #allocation3 [shape = 's32[1]{0}', space=sflag, size = 0x4, scoped, tag = 'scoped memory for tpu_custom_call.1']
    #allocation4 [shape = 's32[1]{0}', space=sflag, size = 0x4, scoped, tag = 'scoped memory for tpu_custom_call.1']
    #allocation5 [shape = 'u8[8192]{0}', space=vmem, size = 0x2000, scoped, tag = 'output window, operand 0, single buffered']
    %8 = vsyncpa [#allocation3], 0
    %9 = vsyncpa [#allocation4], 0
    // Predicated region
    $region2: #{tpu_custom_call.1} parent=1 // pred_check
      _
    $region3: #{tpu_custom_call.1} parent=1 // pred_check_branch
      %11 = sbr.rel (0) target = $region5
    $region4: #{tpu_custom_call.1} parent=1 // pred_region
      %s13 = ssub.s32 256, 256
      %14 = vsyncadd [#allocation3], %s13
      %s15 = sshll.u32 [#allocation2], 4
      %s16 = int_to_ptr.vmem [resolvable:$true] %s15
      %21 = dma.hbm_to_vmem [thread:$0]  %s0, 256, %s16, [#allocation3], 128, 128, 8
    $region5: #{tpu_custom_call.1} parent=1 // pred_fallthru
      _
    // Predicated region
    $region6: #{tpu_custom_call.1} parent=1 // pred_check
      _
    $region7: #{tpu_custom_call.1} parent=1 // pred_check_branch
      %23 = sbr.rel (0) target = $region9
    $region8: #{tpu_custom_call.1} parent=1 // pred_region
      _
    $region9: #{tpu_custom_call.1} parent=1 // pred_fallthru
      _
    // Predicated region
    $region10: #{tpu_custom_call.1} parent=1 // pred_check
      _
    $region11: #{tpu_custom_call.1} parent=1 // pred_check_branch
      %25 = sbr.rel (0) target = $region13
    $region12: #{tpu_custom_call.1} parent=1 // pred_region
      _
    $region13: #{tpu_custom_call.1} parent=1 // pred_fallthru
      _
    // Predicated region
    $region14: #{tpu_custom_call.1} parent=1 // pred_check
      _
    $region15: #{tpu_custom_call.1} parent=1 // pred_check_branch
      %27 = sbr.rel (0) target = $region17
    $region16: #{tpu_custom_call.1} parent=1 // pred_region
      %28 = dma.done [#allocation3], 256
    $region17: #{tpu_custom_call.1} parent=1 // pred_fallthru
      _
    %v29 = vld [vmem:[#allocation2] sm:$0xff]
    %v30 = vld [vmem:[#allocation2 + $0x8] sm:$0xff]
    %vm31 = vcmask 261120
    %v32 = vsel %vm31, %v29, 0.0
    %33 = vadd.xlane.f32.xlu0 %v32
    %v34 = vpop.xlane.xlu0 %33
    %v35 = vsel %vm31, %v30, 0.0
    %36 = vadd.xlane.f32.xlu0 %v35
    %v37 = vpop.xlane.xlu0 %36
    %v38 = vrcp.pop 32.0
    %v39 = vmul.f32 %v34, %v38
    %v40 = vmul.f32 %v37, %v38
    %v41 = vsub.f32 %v29, %v39
    %v42 = vsub.f32 %v30, %v40
    %v43 = vmul.f32 %v41, %v41
    %v44 = vmul.f32 %v42, %v42
    %v45 = vsel %vm31, %v43, 0.0
    %46 = vadd.xlane.f32.xlu0 %v45
    %v47 = vpop.xlane.xlu0 %46
    %v48 = vsel %vm31, %v44, 0.0
    %49 = vadd.xlane.f32.xlu0 %v48
    %v50 = vpop.xlane.xlu0 %49
    %v51 = vmul.f32 %v47, %v38
    %v52 = vmul.f32 %v50, %v38
    %v53 = vadd.f32 %v51, 1e-12
    %v54 = vadd.f32 %v52, 1e-12
    %v55 = vrsqrt.pop %v53
    %v56 = vrsqrt.pop %v54
    %v57 = vmul.f32 %v41, %v55
    %v58 = vmul.f32 %v42, %v56
    %v59 = vld [vmem:[%s1] sm:$0x1]
    %v61 = vlaneseq
    %v62 = vshrl.u32 %v61, 7
    %v63 = vsub.s32 0, %v62
    %v64 = vrot.slane %v59, %v63
    %v66 = vmul.f32 %v57, %v64
    %v67 = vmul.f32 %v58, %v64
    %v68 = vld [vmem:[%s2] sm:$0x1]
    %v70 = vlaneseq
    %v71 = vshrl.u32 %v70, 7
    %v72 = vsub.s32 0, %v71
    %v73 = vrot.slane %v68, %v72
    %v75 = vadd.f32 %v66, %v73
    %v76 = vadd.f32 %v67, %v73
    %77 = vst.msk [vmem:[#allocation5] sm:$0xff] %vm31, %v75
    %78 = vst.msk [vmem:[#allocation5 + $0x8] sm:$0xff] %vm31, %v76
    // Predicated region
    $region18: #{tpu_custom_call.1} parent=1 // pred_check
      _
    $region19: #{tpu_custom_call.1} parent=1 // pred_check_branch
      %80 = sbr.rel (0) target = $region21
    $region20: #{tpu_custom_call.1} parent=1 // pred_region
      %s82 = ssub.s32 256, 256
      %83 = vsyncadd [#allocation4], %s82
      %s84 = sshll.u32 [#allocation5], 4
      %s85 = int_to_ptr.vmem [resolvable:$true] %s84
      %90 = dma.vmem_to_hbm [thread:$0]  %s85, 256, %s3, [#allocation4], 128, 128, 8
    $region21: #{tpu_custom_call.1} parent=1 // pred_fallthru
      _
    // Predicated region
    $region22: #{tpu_custom_call.1} parent=1 // pred_check
      _
    $region23: #{tpu_custom_call.1} parent=1 // pred_check_branch
      %92 = sbr.rel (0) target = $region25
    $region24: #{tpu_custom_call.1} parent=1 // pred_region
      %93 = dma.done [#allocation4], 256
    $region25: #{tpu_custom_call.1} parent=1 // pred_fallthru
      _
    %94 = vsyncpa [#allocation3], 1
    %95 = vsyncpa [#allocation4], 1

</llo_original>
